<compile_context>
chip_gen: v5e
topology: v5e:2x2
jax: 0.10.0
libtpu: 0.0.40
codegen_flags: <defaults>
</compile_context>

<pallas_src>
import jax
import jax.numpy as jnp
from jax.experimental import pallas as pl
from jax.experimental.pallas import tpu as pltpu


def _copy_kernel(x_ref, o_ref):
    # Flatten has no arithmetic; this is just the memory-movement hot path
    # that materializes the (already row-major-flattened) tensor.
    o_ref[...] = x_ref[...]


# Per-tile VMEM budget. With double-buffered input + output blocks the
# pipeline holds ~4x this, so 2 MiB keeps us under the default scoped VMEM
# limit on every generation (16 MiB v5e, 32 MiB v6e/v7x) with headroom on
# v7x's 64 MiB physical VMEM.
_TILE_BUDGET_BYTES = 2 * 1024 * 1024


def _pick_2d_layout(total):
    """Pick (rows, lanes) with lanes % 128 == 0, rows % 8 == 0, lanes maximal.

    Lane-dense, full-sublane layout -> unmasked vld/vst for the copy.
    """
    for lanes in (2048, 1024, 512, 256, 128):
        if total % lanes == 0 and (total // lanes) % 8 == 0:
            return total // lanes, lanes
    return None


def _pick_tile_rows(rows, lanes, itemsize):
    """Largest multiple-of-8 divisor of `rows` whose tile fits the budget."""
    max_rows = max(8, (_TILE_BUDGET_BYTES // (lanes * itemsize)) // 8 * 8)
    best = 8
    t = 8
    while t <= min(rows, max_rows):
        if rows % t == 0:
            best = t
        t += 8
    return best


def _flatten_copy(x_flat, n, f):
    """Materializing Pallas copy of the flattened tensor (lane-dense, tiled)."""
    total = x_flat.size
    itemsize = x_flat.dtype.itemsize
    layout = _pick_2d_layout(total)

    if layout is None:
        # Awkward sizes (flat size not a multiple of 1024 elems): fall back to
        # a single full-array block (block dims == array dims satisfies the
        # (8, 128) rule). Fine for small tensors.
        x2d = jnp.reshape(x_flat, (n, f))
        out = pl.pallas_call(
            _copy_kernel,
            out_shape=jax.ShapeDtypeStruct((n, f), x_flat.dtype),
            grid=(1,),
            in_specs=[pl.BlockSpec((n, f), lambda i: (0, 0))],
            out_specs=pl.BlockSpec((n, f), lambda i: (0, 0)),
            input_output_aliases={0: 0},
            compiler_params=pltpu.CompilerParams(
                dimension_semantics=("arbitrary",)),
        )(x2d)
        return jnp.reshape(out, (n, f))

    rows, lanes = layout
    tile_rows = _pick_tile_rows(rows, lanes, itemsize)
    # Free row-major relabel of the flat buffer into a lane-dense 2-D slab.
    x2d = jnp.reshape(x_flat, (rows, lanes))

    out = pl.pallas_call(
        _copy_kernel,
        out_shape=jax.ShapeDtypeStruct((rows, lanes), x_flat.dtype),
        grid=(rows // tile_rows,),
        in_specs=[pl.BlockSpec((tile_rows, lanes), lambda i: (i, 0))],
        out_specs=pl.BlockSpec((tile_rows, lanes), lambda i: (i, 0)),
        # Output reuses the input buffer (no second (rows, lanes) HBM alloc).
        input_output_aliases={0: 0},
        compiler_params=pltpu.CompilerParams(
            # Row-tile axis is independent -> shard across v7x's 2 TensorCores.
            dimension_semantics=("parallel",)),
    )(x2d)
    return jnp.reshape(out, (n, f))


def flatten(x, *, materialize=False):
    """Pallas/JAX implementation of Flatten.forward.

    x: (N, d1, ..., dk) array (any dtype).
    returns: (N, d1*...*dk) array, same dtype.
    """
    n = x.shape[0]
    f = 1
    for d in x.shape[1:]:
        f *= d

    if not materialize:
        # Highest-value path (perf feedback #1): the row-major collapse of
        # trailing dims of a contiguous array is a metadata-only view in XLA.
        # Zero HBM traffic; matches torch .view semantics exactly.
        return jnp.reshape(x, (n, f))

    # Materializing copy (only if a fresh buffer / forced layout is required).
    return _flatten_copy(jnp.reshape(x, (-1,)), n, f)


if __name__ == "__main__":
    key = jax.random.PRNGKey(0)
    # NCHW input, small shapes: batch=2, channels=4, spatial=16x16.
    x = jax.random.normal(key, (2, 4, 16, 16), dtype=jnp.float32)

    # Reference: plain JAX reshape (same semantics as torch .view(-1, shape)).
    ref = jnp.reshape(x, (x.shape[0], -1))

    # Default zero-cost view path.
    out_view = jax.block_until_ready(flatten(x))

    # Materializing Pallas-kernel path (exercises the kernel).
    out_kernel = jax.block_until_ready(flatten(x, materialize=True))

    assert out_kernel.shape == (2, 4 * 16 * 16), out_kernel.shape
    assert out_kernel.dtype == x.dtype
    assert bool(jnp.array_equal(out_view, ref))
    assert bool(jnp.array_equal(out_kernel, ref))

    print("KERNEL_OK")
</pallas_src>

<mosaic_0001>
module attributes {stable_mosaic.version = 11 : i64} {
  func.func @_copy_kernel(%arg0: i32, %arg1: memref<8x256xf32, #tpu.memory_space<vmem>>, %arg2: memref<8x256xf32, #tpu.memory_space<vmem>>) attributes {dimension_semantics = [#tpu.dimension_semantics<parallel>], iteration_bounds = array<i64: 1>, scalar_prefetch = 0 : i64, scratch_operands = 0 : i64, tpu.core_type = #tpu.core_type<tc>, window_params = [{transform_indices = @transform_0, window_bounds = array<i64: 8, 256>}, {transform_indices = @transform_1, window_bounds = array<i64: 8, 256>}]} {
    %c0 = arith.constant 0 : index
    %c0_0 = arith.constant 0 : index
    %0 = vector.load %arg1[%c0, %c0_0] : memref<8x256xf32, #tpu.memory_space<vmem>>, vector<8x256xf32>
    %c0_1 = arith.constant 0 : index
    %c0_2 = arith.constant 0 : index
    %1 = vector.load %arg2[%c0_1, %c0_2] : memref<8x256xf32, #tpu.memory_space<vmem>>, vector<8x256xf32>
    tpu.vector_store %arg2[%c0_1, %c0_2], %0 {strides = array<i32>} : memref<8x256xf32, #tpu.memory_space<vmem>>, vector<8x256xf32>,
    return
  }
  func.func @transform_0(%arg0: i32) -> (i32, i32) {
    %c0_i32 = arith.constant 0 : i32
    %c0_i32_0 = arith.constant 0 : i32
    return %arg0, %c0_i32 : i32, i32
  }
  func.func @transform_1(%arg0: i32) -> (i32, i32) {
    %c0_i32 = arith.constant 0 : i32
    %c0_i32_0 = arith.constant 0 : i32
    return %arg0, %c0_i32 : i32, i32
  }
}

</mosaic_0001>

<llo_original>
// kernel: tpu_custom_call.1
$region0: #{tpu_custom_call.1}
  #allocation0 [shape = 'u32[]', space=smem, size = 0x4, offset = 0x4, fixed_abs, tag = 'smem constant byte address 0x4 - core index']
  #allocation1 [shape = 'u32[72,128]{1,0:T(1,128)}', space=vmem, size = 0x9000, scoped, tag = 'internal scratch']
  %s0 = inlined_call_operand.hbm [shape: f32[8,256], index: 0, kind: input, shape index: {}, may-alias: {0,1}]
  %s1 = inlined_call_operand.hbm [shape: f32[8,256], index: 1, kind: output, shape index: {}, may-alias: {0,1}]
  %s2 = sld [smem:[#allocation0]]
  $region18: #{tpu_custom_call.1} parent=0
    _
  %s4 = ssub.s32 1, %s2
  %s5 = scalar_select 0, %s4, %s2
  $region1: #{tpu_custom_call.1} parent=0
    #allocation2 [shape = 'u8[8192]{0}', space=vmem, size = 0x2000, scoped, tag = 'input window, operand 0, single buffered']
    #allocation3 [shape = 's32[1]{0}', space=sflag, size = 0x4, scoped, tag = 'scoped memory for tpu_custom_call.1']
    #allocation4 [shape = 's32[1]{0}', space=sflag, size = 0x4, scoped, tag = 'scoped memory for tpu_custom_call.1']
    #allocation5 [shape = 'u8[8192]{0}', space=vmem, size = 0x2000, scoped, tag = 'output window, operand 0, single buffered']
    %6 = vsyncpa [#allocation3], 0
    %7 = vsyncpa [#allocation4], 0
    // Predicated region
    $region2: #{tpu_custom_call.1} parent=1 // pred_check
      _
    $region3: #{tpu_custom_call.1} parent=1 // pred_check_branch
      %9 = sbr.rel (0) target = $region5
    $region4: #{tpu_custom_call.1} parent=1 // pred_region
      %11 = vsyncadd [#allocation3], 0
      %s13 = sshll.u32 %s0, 4
      %s14 = int_to_ptr.hbm [resolvable:$true] %s13
      %s15 = sshll.u32 [#allocation2], 4
      %s16 = int_to_ptr.vmem [resolvable:$true] %s15
      %18 = dma.hbm_to_vmem [thread:$0]  %s14, 256, %s16, [#allocation3]
    $region5: #{tpu_custom_call.1} parent=1 // pred_fallthru
      _
    // Predicated region
    $region6: #{tpu_custom_call.1} parent=1 // pred_check
      _
    $region7: #{tpu_custom_call.1} parent=1 // pred_check_branch
      %20 = sbr.rel (0) target = $region9
    $region8: #{tpu_custom_call.1} parent=1 // pred_region
      %22 = dma.done [#allocation3], 256
    $region9: #{tpu_custom_call.1} parent=1 // pred_fallthru
      _
    %v23 = vld [vmem:[#allocation2] sm:$0xff]
    %v24 = vld [vmem:[#allocation2 + $0x8] sm:$0xff]
    %25 = vst [vmem:[#allocation5] sm:$0xff] %v23
    %26 = vst [vmem:[#allocation5 + $0x8] sm:$0xff] %v24
    // Predicated region
    $region10: #{tpu_custom_call.1} parent=1 // pred_check
      _
    $region11: #{tpu_custom_call.1} parent=1 // pred_check_branch
      %28 = sbr.rel (0) target = $region13
    $region12: #{tpu_custom_call.1} parent=1 // pred_region
      %30 = vsyncadd [#allocation4], 0
      %s32 = sshll.u32 [#allocation5], 4
      %s33 = int_to_ptr.vmem [resolvable:$true] %s32
      %s34 = sshll.u32 %s1, 4
      %s35 = int_to_ptr.hbm [resolvable:$true] %s34
      %37 = dma.vmem_to_hbm [thread:$0]  %s33, 256, %s35, [#allocation4]
    $region13: #{tpu_custom_call.1} parent=1 // pred_fallthru
      _
    // Predicated region
    $region14: #{tpu_custom_call.1} parent=1 // pred_check
      _
    $region15: #{tpu_custom_call.1} parent=1 // pred_check_branch
      %39 = sbr.rel (0) target = $region17
    $region16: #{tpu_custom_call.1} parent=1 // pred_region
      %41 = dma.done [#allocation4], 256
    $region17: #{tpu_custom_call.1} parent=1 // pred_fallthru
      _
    %42 = vsyncpa [#allocation3], 1
    %43 = vsyncpa [#allocation4], 1

</llo_original>
